<compile_context>
chip_gen: v7x
topology: tpu7x:2x2x1
jax: 0.10.0
libtpu: 0.0.40
codegen_flags: <defaults>
</compile_context>

<pallas_src>
import jax
import jax.numpy as jnp
from jax.experimental import pallas as pl
from jax.experimental.pallas import tpu as pltpu


def _round_up(x, m):
    return ((x + m - 1) // m) * m


def _pad2d(a, rows, cols):
    """Zero-pad a 2-D array up to (rows, cols); no-op if already that shape."""
    if a.shape == (rows, cols):
        return a
    return jnp.zeros((rows, cols), a.dtype).at[:a.shape[0], :a.shape[1]].set(a)


# --------------------------------------------------------------------------
# Fused small-problem kernel: everything resident in VMEM, single launch.
# --------------------------------------------------------------------------
def _fused_kernel(x_ref, at_ref, bt_ref, o_ref):
    x = x_ref[...]
    sino = jnp.dot(x, at_ref[...], preferred_element_type=jnp.float32)
    bx = jnp.dot(sino, bt_ref[...], preferred_element_type=jnp.float32)
    o_ref[...] = (x.astype(jnp.float32) - bx).astype(o_ref.dtype)


# --------------------------------------------------------------------------
# Tiled stage 1: sino[:, j] = sum_k x[:, k] @ A^T[k, j]
# --------------------------------------------------------------------------
def _sino_kernel(x_ref, at_ref, sino_ref, acc_ref):
    k = pl.program_id(1)

    @pl.when(k == 0)
    def _():
        acc_ref[...] = jnp.zeros_like(acc_ref)

    acc_ref[...] += jnp.dot(x_ref[...], at_ref[...],
                            preferred_element_type=jnp.float32)

    @pl.when(k == pl.num_programs(1) - 1)
    def _():
        sino_ref[...] = acc_ref[...].astype(sino_ref.dtype)


# --------------------------------------------------------------------------
# Tiled stage 2: y[:, i] = x[:, i] - sum_k sino[:, k] @ B^T[k, i]
# --------------------------------------------------------------------------
def _residual_kernel(x_ref, sino_ref, bt_ref, o_ref, acc_ref):
    k = pl.program_id(1)

    @pl.when(k == 0)
    def _():
        acc_ref[...] = jnp.zeros_like(acc_ref)

    acc_ref[...] += jnp.dot(sino_ref[...], bt_ref[...],
                            preferred_element_type=jnp.float32)

    @pl.when(k == pl.num_programs(1) - 1)
    def _():
        o_ref[...] = (x_ref[...].astype(jnp.float32)
                      - acc_ref[...]).astype(o_ref.dtype)


def null_space_layer_pallas(x_nchw, A, B, *, tile_n=512, tile_m=512,
                            operator_dtype=None,
                            fused_vmem_budget_bytes=12 * 1024 * 1024):
    """y = x - B(A(x)) with x: (batch, C, H, W) f32, A: (M, N), B: (N, M), N=H*W."""
    batch, c, h, w = x_nchw.shape
    n = h * w
    m = A.shape[0]
    bc = batch * c

    op_dtype = jnp.dtype(operator_dtype) if operator_dtype is not None else A.dtype
    op_itemsize = jnp.dtype(op_dtype).itemsize

    # Tile choices: lane granule 128, sublane granule 8; pad dims to tiles.
    tn = min(tile_n, _round_up(n, 128))
    tm = min(tile_m, _round_up(m, 128))
    n_p = _round_up(n, tn)
    m_p = _round_up(m, tm)
    bc_p = _round_up(bc, 8)

    x2d = x_nchw.reshape(bc, n)
    x_p = _pad2d(x2d, bc_p, n_p)
    at_p = _pad2d(A.T.astype(op_dtype), n_p, m_p)
    bt_p = _pad2d(B.T.astype(op_dtype), m_p, n_p)

    x_bytes = bc_p * n_p * x_p.dtype.itemsize
    op_bytes = n_p * m_p * op_itemsize
    out_bytes = bc_p * n_p * x2d.dtype.itemsize
    sino_bytes = bc_p * m_p * 4

    # ---- Fast path: whole problem resident in VMEM, single fused kernel ----
    fused_footprint = 2 * (x_bytes + 2 * op_bytes + out_bytes) + sino_bytes
    if fused_footprint <= fused_vmem_budget_bytes:
        y_p = pl.pallas_call(
            _fused_kernel,
            out_shape=jax.ShapeDtypeStruct((bc_p, n_p), x2d.dtype),
            cost_estimate=pl.CostEstimate(
                flops=4 * bc_p * n_p * m_p,
                transcendentals=0,
                bytes_accessed=x_bytes + 2 * op_bytes + out_bytes),
        )(x_p, at_p, bt_p)
        return y_p[:bc, :n].reshape(batch, c, h, w)

    # ---- Stage 1: sino = x @ A^T  -----------------------------------------
    sino = pl.pallas_call(
        _sino_kernel,
        out_shape=jax.ShapeDtypeStruct((bc_p, m_p), jnp.float32),
        grid_spec=pltpu.PrefetchScalarGridSpec(
            num_scalar_prefetch=0,
            grid=(m_p // tm, n_p // tn),
            in_specs=[
                pl.BlockSpec((bc_p, tn), lambda j, k: (0, k)),   # x tile
                pl.BlockSpec((tn, tm), lambda j, k: (k, j)),     # A^T tile
            ],
            out_specs=pl.BlockSpec((bc_p, tm), lambda j, k: (0, j)),
            scratch_shapes=[pltpu.VMEM((bc_p, tm), jnp.float32)],
        ),
        compiler_params=pltpu.CompilerParams(
            dimension_semantics=("parallel", "arbitrary")),
        cost_estimate=pl.CostEstimate(
            flops=2 * bc_p * n_p * m_p,
            transcendentals=0,
            bytes_accessed=x_bytes + op_bytes + sino_bytes),
    )(x_p, at_p)

    # ---- Stage 2: y = x - sino @ B^T  -------------------------------------
    y_p = pl.pallas_call(
        _residual_kernel,
        out_shape=jax.ShapeDtypeStruct((bc_p, n_p), x2d.dtype),
        grid_spec=pltpu.PrefetchScalarGridSpec(
            num_scalar_prefetch=0,
            grid=(n_p // tn, m_p // tm),
            in_specs=[
                pl.BlockSpec((bc_p, tn), lambda i, k: (0, i)),   # x tile
                pl.BlockSpec((bc_p, tm), lambda i, k: (0, k)),   # sino tile
                pl.BlockSpec((tm, tn), lambda i, k: (k, i)),     # B^T tile
            ],
            out_specs=pl.BlockSpec((bc_p, tn), lambda i, k: (0, i)),
            scratch_shapes=[pltpu.VMEM((bc_p, tn), jnp.float32)],
        ),
        compiler_params=pltpu.CompilerParams(
            dimension_semantics=("parallel", "arbitrary")),
        cost_estimate=pl.CostEstimate(
            flops=2 * bc_p * n_p * m_p,
            transcendentals=0,
            bytes_accessed=x_bytes + op_bytes + sino_bytes + out_bytes),
    )(x_p, sino, bt_p)

    return y_p[:bc, :n].reshape(batch, c, h, w)


if __name__ == "__main__":
    # Small, TPU-tile-friendly shapes consistent with the module:
    #   image_size = 16  -> N = 256 (lane-aligned)
    #   n_angles   = 8, detector bins = image_size -> M = 8*16 = 128
    #   batch = 2, channels = 4 -> BC = 8 (sublane-aligned)
    image_size = 16
    n_angles = 8
    batch, channels = 2, 4

    N = image_size * image_size
    M = n_angles * image_size

    key = jax.random.PRNGKey(0)
    kx, ka = jax.random.split(key)

    x = jax.random.normal(kx, (batch, channels, image_size, image_size),
                          dtype=jnp.float32)

    # Deterministic synthetic operator pair: A random, B = pinv(A).
    A = jax.random.normal(ka, (M, N), dtype=jnp.float32) / jnp.sqrt(N)
    B = jnp.linalg.pinv(A)  # (N, M)

    # Fused small-problem path (everything fits in VMEM).
    y = null_space_layer_pallas(x, A, B)
    y = jax.block_until_ready(y)

    # General tiled path (force it by disabling the fused budget).
    y_tiled = null_space_layer_pallas(x, A, B, fused_vmem_budget_bytes=0)
    y_tiled = jax.block_until_ready(y_tiled)

    # Sanity check against pure-JAX reference of y = x - B(A(x)).
    x2d = x.reshape(batch * channels, N)
    y_ref = (x2d - (x2d @ A.T) @ B.T).reshape(x.shape)
    assert jnp.allclose(y, y_ref, atol=1e-4, rtol=1e-4), "fused path mismatch"
    assert jnp.allclose(y_tiled, y_ref, atol=1e-4, rtol=1e-4), "tiled path mismatch"

    print("KERNEL_OK")
</pallas_src>

<mosaic_0001>
module attributes {stable_mosaic.version = 11 : i64} {
  func.func @_fused_kernel(%arg0: memref<8x256xf32, #tpu.memory_space<vmem>>, %arg1: memref<256x128xf32, #tpu.memory_space<vmem>>, %arg2: memref<128x256xf32, #tpu.memory_space<vmem>>, %arg3: memref<8x256xf32, #tpu.memory_space<vmem>>) attributes {dimension_semantics = [], scalar_prefetch = 0 : i64, scratch_operands = 0 : i64, tpu.core_type = #tpu.core_type<tc>} {
    %c0 = arith.constant 0 : index
    %c0_0 = arith.constant 0 : index
    %0 = vector.load %arg0[%c0, %c0_0] : memref<8x256xf32, #tpu.memory_space<vmem>>, vector<8x256xf32>
    %c0_1 = arith.constant 0 : index
    %c0_2 = arith.constant 0 : index
    %1 = vector.load %arg1[%c0_1, %c0_2] : memref<256x128xf32, #tpu.memory_space<vmem>>, vector<256x128xf32>
    %cst = arith.constant dense<0.000000e+00> : vector<8x128xf32>
    %2 = tpu.matmul %0, %1, %cst {dimension_numbers = #tpu.dot_dimension_numbers<[1], [0], [0], [1], [0, 0, 1, 1], [], []>} : vector<8x256xf32>, vector<256x128xf32>, vector<8x128xf32> -> vector<8x128xf32>
    %c0_3 = arith.constant 0 : index
    %c0_4 = arith.constant 0 : index
    %3 = vector.load %arg2[%c0_3, %c0_4] : memref<128x256xf32, #tpu.memory_space<vmem>>, vector<128x256xf32>
    %cst_5 = arith.constant dense<0.000000e+00> : vector<8x256xf32>
    %4 = tpu.matmul %2, %3, %cst_5 {dimension_numbers = #tpu.dot_dimension_numbers<[1], [0], [0], [1], [0, 0, 1, 1], [], []>} : vector<8x128xf32>, vector<128x256xf32>, vector<8x256xf32> -> vector<8x256xf32>
    %5 = arith.subf %0, %4 : vector<8x256xf32>
    %c0_6 = arith.constant 0 : index
    %c0_7 = arith.constant 0 : index
    %6 = vector.load %arg3[%c0_6, %c0_7] : memref<8x256xf32, #tpu.memory_space<vmem>>, vector<8x256xf32>
    tpu.vector_store %arg3[%c0_6, %c0_7], %5 {strides = array<i32>} : memref<8x256xf32, #tpu.memory_space<vmem>>, vector<8x256xf32>,
    return
  }
}

</mosaic_0001>

<llo_original>
// kernel: tpu_custom_call.1
$region0: #{tpu_custom_call.1}
  #allocation0 [shape = 'u32[]', space=smem, size = 0x4, offset = 0x4, fixed_abs, tag = 'smem constant byte address 0x4 - core index']
  #allocation1 [shape = 'u32[144,128]{1,0:T(1,128)}', space=vmem, size = 0x12000, scoped, tag = 'internal scratch']
  %s0 = inlined_call_operand.hbm [shape: f32[8,256], index: 0, kind: input, shape index: {}]
  %s1 = inlined_call_operand.hbm [shape: f32[256,128], index: 1, kind: input, shape index: {}]
  %s2 = inlined_call_operand.hbm [shape: f32[128,256], index: 2, kind: input, shape index: {}]
  %s3 = inlined_call_operand.hbm [shape: f32[8,256], index: 3, kind: output, shape index: {}]
  %s4 = sld [smem:[#allocation0]]
  $region34: #{tpu_custom_call.1} parent=0
    _
  %s6 = ssub.s32 1, %s4
  %s7 = scalar_select 0, %s6, %s4
  $region1: #{tpu_custom_call.1} parent=0
    #allocation2 [shape = 'u8[8192]{0}', space=vmem, size = 0x2000, scoped, tag = 'input window, operand 0, single buffered']
    #allocation3 [shape = 's32[1]{0}', space=sflag, size = 0x4, scoped, tag = 'scoped memory for tpu_custom_call.1']
    #allocation4 [shape = 's32[1]{0}', space=sflag, size = 0x4, scoped, tag = 'scoped memory for tpu_custom_call.1']
    #allocation5 [shape = 'u8[131072]{0}', space=vmem, size = 0x20000, scoped, tag = 'input window, operand 1, single buffered']
    #allocation6 [shape = 's32[1]{0}', space=sflag, size = 0x4, scoped, tag = 'scoped memory for tpu_custom_call.1']
    #allocation7 [shape = 'u8[131072]{0}', space=vmem, size = 0x20000, scoped, tag = 'input window, operand 2, single buffered']
    #allocation8 [shape = 'u8[8192]{0}', space=vmem, size = 0x2000, scoped, tag = 'output window, operand 0, single buffered']
    %8 = vsyncpa [#allocation3], 0
    %9 = vsyncpa [#allocation6], 0
    %10 = vsyncpa [#allocation4], 0
    // Predicated region
    $region2: #{tpu_custom_call.1} parent=1 // pred_check
      _
    $region3: #{tpu_custom_call.1} parent=1 // pred_check_branch
      %12 = sbr.rel (0) target = $region5
    $region4: #{tpu_custom_call.1} parent=1 // pred_region
      %s14 = ssub.s32 256, 256
      %15 = vsyncadd [#allocation3], %s14
      %s17 = sshll.u32 [#allocation2], 4
      %s18 = int_to_ptr.vmem [resolvable:$true] %s17
      %20 = dma.hbm_to_vmem [thread:$0]  %s0, 256, %s18, [#allocation3]
    $region5: #{tpu_custom_call.1} parent=1 // pred_fallthru
      _
    // Predicated region
    $region6: #{tpu_custom_call.1} parent=1 // pred_check
      _
    $region7: #{tpu_custom_call.1} parent=1 // pred_check_branch
      %22 = sbr.rel (0) target = $region9
    $region8: #{tpu_custom_call.1} parent=1 // pred_region
      %s24 = ssub.s32 4096, 4096
      %25 = vsyncadd [#allocation6], %s24
      %s26 = sshll.u32 [#allocation5], 4
      %s27 = int_to_ptr.vmem [resolvable:$true] %s26
      %32 = dma.hbm_to_vmem [thread:$0]  %s1, 4096, %s27, [#allocation6], 128, 128, 8
    $region9: #{tpu_custom_call.1} parent=1 // pred_fallthru
      _
    // Predicated region
    $region10: #{tpu_custom_call.1} parent=1 // pred_check
      _
    $region11: #{tpu_custom_call.1} parent=1 // pred_check_branch
      %34 = sbr.rel (0) target = $region13
    $region12: #{tpu_custom_call.1} parent=1 // pred_region
      %s36 = ssub.s32 4096, 4096
      %37 = vsyncadd [#allocation6], %s36
      %s38 = sshll.u32 [#allocation7], 4
      %s39 = int_to_ptr.vmem [resolvable:$true] %s38
      %44 = dma.hbm_to_vmem [thread:$0]  %s2, 4096, %s39, [#allocation6], 256, 256, 16
    $region13: #{tpu_custom_call.1} parent=1 // pred_fallthru
      _
    // Predicated region
    $region14: #{tpu_custom_call.1} parent=1 // pred_check
      _
    $region15: #{tpu_custom_call.1} parent=1 // pred_check_branch
      %46 = sbr.rel (0) target = $region17
    $region16: #{tpu_custom_call.1} parent=1 // pred_region
      %47 = dma.done [#allocation3], 256
    $region17: #{tpu_custom_call.1} parent=1 // pred_fallthru
      _
    // Predicated region
    $region18: #{tpu_custom_call.1} parent=1 // pred_check
      _
    $region19: #{tpu_custom_call.1} parent=1 // pred_check_branch
      %49 = sbr.rel (0) target = $region21
    $region20: #{tpu_custom_call.1} parent=1 // pred_region
      %50 = dma.done [#allocation6], 4096
    $region21: #{tpu_custom_call.1} parent=1 // pred_fallthru
      _
    // Predicated region
    $region22: #{tpu_custom_call.1} parent=1 // pred_check
      _
    $region23: #{tpu_custom_call.1} parent=1 // pred_check_branch
      %52 = sbr.rel (0) target = $region25
    $region24: #{tpu_custom_call.1} parent=1 // pred_region
      %53 = dma.done [#allocation6], 4096
    $region25: #{tpu_custom_call.1} parent=1 // pred_fallthru
      _
    %v54 = vld [vmem:[#allocation2] sm:$0xff]
    %v55 = vld [vmem:[#allocation2 + $0x8] sm:$0xff]
    %v56 = vld [vmem:[#allocation5] sm:$0xff]
    %v57 = vld [vmem:[#allocation5 + $0x8] sm:$0xff]
    %v58 = vld [vmem:[#allocation5 + $0x10] sm:$0xff]
    %v59 = vld [vmem:[#allocation5 + $0x18] sm:$0xff]
    %v60 = vld [vmem:[#allocation5 + $0x20] sm:$0xff]
    %v61 = vld [vmem:[#allocation5 + $0x28] sm:$0xff]
    %v62 = vld [vmem:[#allocation5 + $0x30] sm:$0xff]
    %v63 = vld [vmem:[#allocation5 + $0x38] sm:$0xff]
    %v64 = vld [vmem:[#allocation5 + $0x40] sm:$0xff]
    %v65 = vld [vmem:[#allocation5 + $0x48] sm:$0xff]
    %v66 = vld [vmem:[#allocation5 + $0x50] sm:$0xff]
    %v67 = vld [vmem:[#allocation5 + $0x58] sm:$0xff]
    %v68 = vld [vmem:[#allocation5 + $0x60] sm:$0xff]
    %v69 = vld [vmem:[#allocation5 + $0x68] sm:$0xff]
    %v70 = vld [vmem:[#allocation5 + $0x70] sm:$0xff]
    %v71 = vld [vmem:[#allocation5 + $0x78] sm:$0xff]
    %v72 = vld [vmem:[#allocation5 + $0x80] sm:$0xff]
    %v73 = vld [vmem:[#allocation5 + $0x88] sm:$0xff]
    %v74 = vld [vmem:[#allocation5 + $0x90] sm:$0xff]
    %v75 = vld [vmem:[#allocation5 + $0x98] sm:$0xff]
    %v76 = vld [vmem:[#allocation5 + $0xa0] sm:$0xff]
    %v77 = vld [vmem:[#allocation5 + $0xa8] sm:$0xff]
    %v78 = vld [vmem:[#allocation5 + $0xb0] sm:$0xff]
    %v79 = vld [vmem:[#allocation5 + $0xb8] sm:$0xff]
    %v80 = vld [vmem:[#allocation5 + $0xc0] sm:$0xff]
    %v81 = vld [vmem:[#allocation5 + $0xc8] sm:$0xff]
    %v82 = vld [vmem:[#allocation5 + $0xd0] sm:$0xff]
    %v83 = vld [vmem:[#allocation5 + $0xd8] sm:$0xff]
    %v84 = vld [vmem:[#allocation5 + $0xe0] sm:$0xff]
    %v85 = vld [vmem:[#allocation5 + $0xe8] sm:$0xff]
    %v86 = vld [vmem:[#allocation5 + $0xf0] sm:$0xff]
    %v87 = vld [vmem:[#allocation5 + $0xf8] sm:$0xff]
    %88 = vmatprep.subr.mxu0 0.0
    %89 = vmatpush1.msra.mxu0 %v56
    %90 = vmatprep.subr.mxu0 0.0
    %91 = vmatpush1.msra.mxu0 %v57
    %92 = vmatprep.subr.mxu0 0.0
    %93 = vmatpush1.msra.mxu0 %v58
    %94 = vmatprep.subr.mxu0 0.0
    %95 = vmatpush1.msra.mxu0 %v59
    %96 = vmatprep.subr.mxu0 0.0
    %97 = vmatpush1.msra.mxu0 %v60
    %98 = vmatprep.subr.mxu0 0.0
    %99 = vmatpush1.msra.mxu0 %v61
    %100 = vmatprep.subr.mxu0 0.0
    %101 = vmatpush1.msra.mxu0 %v62
    %102 = vmatprep.subr.mxu0 0.0
    %103 = vmatpush1.msra.mxu0 %v63
    %104 = vmatprep.subr.mxu0 0.0
    %105 = vmatpush1.msra.mxu0 %v64
    %106 = vmatprep.subr.mxu0 0.0
    %107 = vmatpush1.msra.mxu0 %v65
    %108 = vmatprep.subr.mxu0 0.0
    %109 = vmatpush1.msra.mxu0 %v66
    %110 = vmatprep.subr.mxu0 0.0
    %111 = vmatpush1.msra.mxu0 %v67
    %112 = vmatprep.subr.mxu0 0.0
    %113 = vmatpush1.msra.mxu0 %v68
    %114 = vmatprep.subr.mxu0 0.0
    %115 = vmatpush1.msra.mxu0 %v69
    %116 = vmatprep.subr.mxu0 0.0
    %117 = vmatpush1.msra.mxu0 %v70
    %118 = vmatprep.subr.mxu0 0.0
    %119 = vmatpush1.msra.mxu0 %v71
    %120 = vmatprep.subr.mxu0 0.0
    %121 = vmatpush1.msra.mxu0 %v72
    %122 = vmatprep.subr.mxu0 0.0
    %123 = vmatpush1.msra.mxu0 %v73
    %124 = vmatprep.subr.mxu0 0.0
    %125 = vmatpush1.msra.mxu0 %v74
    %126 = vmatprep.subr.mxu0 0.0
    %127 = vmatpush1.msra.mxu0 %v75
    %128 = vmatprep.subr.mxu0 0.0
    %129 = vmatpush1.msra.mxu0 %v76
    %130 = vmatprep.subr.mxu0 0.0
    %131 = vmatpush1.msra.mxu0 %v77
    %132 = vmatprep.subr.mxu0 0.0
    %133 = vmatpush1.msra.mxu0 %v78
    %134 = vmatprep.subr.mxu0 0.0
    %135 = vmatpush1.msra.mxu0 %v79
    %136 = vmatprep.subr.mxu0 0.0
    %137 = vmatpush1.msra.mxu0 %v80
    %138 = vmatprep.subr.mxu0 0.0
    %139 = vmatpush1.msra.mxu0 %v81
    %140 = vmatprep.subr.mxu0 0.0
    %141 = vmatpush1.msra.mxu0 %v82
    %142 = vmatprep.subr.mxu0 0.0
    %143 = vmatpush1.msra.mxu0 %v83
    %144 = vmatprep.subr.mxu0 0.0
    %145 = vmatpush1.msra.mxu0 %v84
    %146 = vmatprep.subr.mxu0 0.0
    %147 = vmatpush1.msra.mxu0 %v85
    %148 = vmatprep.subr.mxu0 0.0
    %149 = vmatpush1.msra.mxu0 %v86
    %150 = vmatprep.subr.mxu0 0.0
    %151 = vmatpush1.msra.mxu0 %v87
    %152 = vmatprep.mubr.f32.mxu0 %v55
    %153 = vmatmul.mubr.f32.gmra.mrb[0].mxu0 %v54
    %v154 = vpop.f32.mrb[0].mxu0
    %v155 = vadd.f32 0.0, %v154
    %v156 = vpop.f32.mrb[0].mxu0
    %157 = vdwg.mxu0
    %v158 = vld [vmem:[#allocation7] sm:$0xff]
    %v159 = vld [vmem:[#allocation7 + $0x8] sm:$0xff]
    %v160 = vld [vmem:[#allocation7 + $0x10] sm:$0xff]
    %v161 = vld [vmem:[#allocation7 + $0x18] sm:$0xff]
    %v162 = vld [vmem:[#allocation7 + $0x20] sm:$0xff]
    %v163 = vld [vmem:[#allocation7 + $0x28] sm:$0xff]
    %v164 = vld [vmem:[#allocation7 + $0x30] sm:$0xff]
    %v165 = vld [vmem:[#allocation7 + $0x38] sm:$0xff]
    %v166 = vld [vmem:[#allocation7 + $0x40] sm:$0xff]
    %v167 = vld [vmem:[#allocation7 + $0x48] sm:$0xff]
    %v168 = vld [vmem:[#allocation7 + $0x50] sm:$0xff]
    %v169 = vld [vmem:[#allocation7 + $0x58] sm:$0xff]
    %v170 = vld [vmem:[#allocation7 + $0x60] sm:$0xff]
    %v171 = vld [vmem:[#allocation7 + $0x68] sm:$0xff]
    %v172 = vld [vmem:[#allocation7 + $0x70] sm:$0xff]
    %v173 = vld [vmem:[#allocation7 + $0x78] sm:$0xff]
    %v174 = vld [vmem:[#allocation7 + $0x80] sm:$0xff]
    %v175 = vld [vmem:[#allocation7 + $0x88] sm:$0xff]
    %v176 = vld [vmem:[#allocation7 + $0x90] sm:$0xff]
    %v177 = vld [vmem:[#allocation7 + $0x98] sm:$0xff]
    %v178 = vld [vmem:[#allocation7 + $0xa0] sm:$0xff]
    %v179 = vld [vmem:[#allocation7 + $0xa8] sm:$0xff]
    %v180 = vld [vmem:[#allocation7 + $0xb0] sm:$0xff]
    %v181 = vld [vmem:[#allocation7 + $0xb8] sm:$0xff]
    %v182 = vld [vmem:[#allocation7 + $0xc0] sm:$0xff]
    %v183 = vld [vmem:[#allocation7 + $0xc8] sm:$0xff]
    %v184 = vld [vmem:[#allocation7 + $0xd0] sm:$0xff]
    %v185 = vld [vmem:[#allocation7 + $0xd8] sm:$0xff]
    %v186 = vld [vmem:[#allocation7 + $0xe0] sm:$0xff]
    %v187 = vld [vmem:[#allocation7 + $0xe8] sm:$0xff]
    %v188 = vld [vmem:[#allocation7 + $0xf0] sm:$0xff]
    %v189 = vld [vmem:[#allocation7 + $0xf8] sm:$0xff]
    %190 = vmatprep.subr.mxu0 %v159
    %191 = vmatpush1.msra.mxu0 %v158
    %192 = vmatprep.subr.mxu0 %v161
    %193 = vmatpush1.msra.mxu0 %v160
    %194 = vmatprep.subr.mxu0 %v163
    %195 = vmatpush1.msra.mxu0 %v162
    %196 = vmatprep.subr.mxu0 %v165
    %197 = vmatpush1.msra.mxu0 %v164
    %198 = vmatprep.subr.mxu0 %v167
    %199 = vmatpush1.msra.mxu0 %v166
    %200 = vmatprep.subr.mxu0 %v169
    %201 = vmatpush1.msra.mxu0 %v168
    %202 = vmatprep.subr.mxu0 %v171
    %203 = vmatpush1.msra.mxu0 %v170
    %204 = vmatprep.subr.mxu0 %v173
    %205 = vmatpush1.msra.mxu0 %v172
    %206 = vmatprep.subr.mxu0 %v175
    %207 = vmatpush1.msra.mxu0 %v174
    %208 = vmatprep.subr.mxu0 %v177
    %209 = vmatpush1.msra.mxu0 %v176
    %210 = vmatprep.subr.mxu0 %v179
    %211 = vmatpush1.msra.mxu0 %v178
    %212 = vmatprep.subr.mxu0 %v181
    %213 = vmatpush1.msra.mxu0 %v180
    %214 = vmatprep.subr.mxu0 %v183
    %215 = vmatpush1.msra.mxu0 %v182
    %216 = vmatprep.subr.mxu0 %v185
    %217 = vmatpush1.msra.mxu0 %v184
    %218 = vmatprep.subr.mxu0 %v187
    %219 = vmatpush1.msra.mxu0 %v186
    %220 = vmatprep.subr.mxu0 %v189
    %221 = vmatpush1.msra.mxu0 %v188
    %222 = vmatprep.subr.mxu0 0.0
    %223 = vmatpush1.msra.mxu0 0.0
    %224 = vmatprep.subr.mxu0 0.0
    %225 = vmatpush1.msra.mxu0 0.0
    %226 = vmatprep.subr.mxu0 0.0
    %227 = vmatpush1.msra.mxu0 0.0
    %228 = vmatprep.subr.mxu0 0.0
    %229 = vmatpush1.msra.mxu0 0.0
    %230 = vmatprep.subr.mxu0 0.0
    %231 = vmatpush1.msra.mxu0 0.0
    %232 = vmatprep.subr.mxu0 0.0
    %233 = vmatpush1.msra.mxu0 0.0
    %234 = vmatprep.subr.mxu0 0.0
    %235 = vmatpush1.msra.mxu0 0.0
    %236 = vmatprep.subr.mxu0 0.0
    %237 = vmatpush1.msra.mxu0 0.0
    %238 = vmatprep.subr.mxu0 0.0
    %239 = vmatpush1.msra.mxu0 0.0
    %240 = vmatprep.subr.mxu0 0.0
    %241 = vmatpush1.msra.mxu0 0.0
    %242 = vmatprep.subr.mxu0 0.0
    %243 = vmatpush1.msra.mxu0 0.0
    %244 = vmatprep.subr.mxu0 0.0
    %245 = vmatpush1.msra.mxu0 0.0
    %246 = vmatprep.subr.mxu0 0.0
    %247 = vmatpush1.msra.mxu0 0.0
    %248 = vmatprep.subr.mxu0 0.0
    %249 = vmatpush1.msra.mxu0 0.0
    %250 = vmatprep.subr.mxu0 0.0
    %251 = vmatpush1.msra.mxu0 0.0
    %252 = vmatprep.subr.mxu0 0.0
    %253 = vmatpush1.msra.mxu0 0.0
    %254 = vmatprep.mubr.f32.mxu0 0.0
    %255 = vmatmul.mubr.f32.gmra.mrb[0].mxu0 %v155
    %v256 = vpop.f32.mrb[0].mxu0
    %v257 = vadd.f32 0.0, %v256
    %v258 = vpop.f32.mrb[0].mxu0
    %v259 = vadd.f32 0.0, %v258
    %260 = vdwg.mxu0
    %v261 = vsub.f32 %v54, %v257
    %v262 = vsub.f32 %v55, %v259
    %263 = vst [vmem:[#allocation8] sm:$0xff] %v261
    %264 = vst [vmem:[#allocation8 + $0x8] sm:$0xff] %v262
    // Predicated region
    $region26: #{tpu_custom_call.1} parent=1 // pred_check
      _
    $region27: #{tpu_custom_call.1} parent=1 // pred_check_branch
      %266 = sbr.rel (0) target = $region29
    $region28: #{tpu_custom_call.1} parent=1 // pred_region
      %s268 = ssub.s32 256, 256
      %269 = vsyncadd [#allocation4], %s268
      %s271 = sshll.u32 [#allocation8], 4
      %s272 = int_to_ptr.vmem [resolvable:$true] %s271
      %274 = dma.vmem_to_hbm [thread:$0]  %s272, 256, %s3, [#allocation4]
    $region29: #{tpu_custom_call.1} parent=1 // pred_fallthru
      _
    // Predicated region
    $region30: #{tpu_custom_call.1} parent=1 // pred_check
      _
    $region31: #{tpu_custom_call.1} parent=1 // pred_check_branch
      %276 = sbr.rel (0) target = $region33
    $region32: #{tpu_custom_call.1} parent=1 // pred_region
      %277 = dma.done [#allocation4], 256
    $region33: #{tpu_custom_call.1} parent=1 // pred_fallthru
      _
    %278 = vsyncpa [#allocation3], 1
    %279 = vsyncpa [#allocation6], 1
    %280 = vsyncpa [#allocation4], 1

</llo_original>
